<compile_context>
chip_gen: v7x
topology: tpu7x:2x2x1
jax: 0.10.0
libtpu: 0.0.40
codegen_flags: <defaults>
</compile_context>

<pallas_src>
import numpy as np
import jax
import jax.numpy as jnp
from jax.experimental import pallas as pl
from jax.experimental.pallas import tpu as pltpu

# ---- model config (small, consistent with the PyTorch module) ----
NUM_FEAT = 100
NUM_FIELD = 8                      # F
EMB = 16                           # D (embedding_size)
CIN_SIZES = [8, 8]                 # cin_layer_sizes
DEEP_SIZES = [32, 32]              # deep_layer_sizes
BATCH = 8
SPLIT_HALF = True

INPUT_DIM = NUM_FIELD * EMB        # 128
H1 = CIN_SIZES[0]                  # 8
H1_HALF = H1 // 2                  # 4  (split_half, not-last CIN layer)
H2 = CIN_SIZES[1]                  # 8
FC_INPUT_DIM = H1_HALF + H2        # 12
DEEP1, DEEP2 = DEEP_SIZES          # 32, 32
BN_EPS = 1e-5

# ---- weight-slab row layout (all rows 128 lanes wide, f32) ----
R_D1 = 0        # rows  0..39 : BN-folded w_d1^T (32,128); row 32 = w_o_lin*w_lin^T; 33..39 zero
N_D1 = 40
R_C1 = 40       # rows 40..47 : w_c1 (8,64) in lanes 0..63; b_c1 column in lane 64
R_C2 = 48       # rows 48..55 : w_c2 (8,32) in lanes 0..31; b_c2 column in lane 32
R_D2 = 56       # rows 56..87 : BN-folded w_d2^T (32,32) in lanes 0..31; b_d1 lane 32; b_d2 lane 33
R_HEAD = 88     # row 88: lanes 0..15 = [0*4 | w_o_r1 | w_o_r2]; row 89: lanes 0..31 = w_o_deep
                # row 90: lane 0 = b_out + b_lin * w_o_lin
SLAB_ROWS = 96


# ------------------------------------------------------------------
# Pallas kernel: whole batch in one grid step, 4 operands.
# ------------------------------------------------------------------
def xdeepfm_kernel(
    emb_fbd_ref,   # (F, B*D)      embeddings, fields x (batch-major lanes)
    emb_fdb_ref,   # (F*D, B)      embeddings, flat-feature x batch
    w_ref,         # (96, 128)     packed weight slab (see layout above)
    seg_ref,       # (B*D, B)      0/1 segment-sum matrix (per-sample D reduce)
    out_ref,       # (1, B)
):
    x0 = emb_fbd_ref[...]                                   # (F, B*D)
    xT = emb_fdb_ref[...]                                   # (F*D, B)
    f, bd = x0.shape                                        # (8, 128), static

    # --- CIN layer 1: z1[h*F+m, :] = x0[h,:]*x0[m,:]; conv1d(k=1) == matmul ---
    z1 = (x0[:, None, :] * x0[None, :, :]).reshape(f * f, bd)            # (F*F, B*D)
    x1 = jnp.maximum(
        jnp.dot(w_ref[R_C1:R_C1 + H1, 0:f * f], z1,
                preferred_element_type=jnp.float32)
        + w_ref[R_C1:R_C1 + H1, f * f:f * f + 1], 0.0)                   # (H1, B*D)
    next_h = x1[:H1_HALF, :]                                             # split_half first half

    # --- CIN layer 2 (last layer: whole output goes to res) ---
    z2 = (next_h[:, None, :] * x0[None, :, :]).reshape(H1_HALF * f, bd)  # (H1_HALF*F, B*D)
    hi2 = jnp.maximum(
        jnp.dot(w_ref[R_C2:R_C2 + H2, 0:H1_HALF * f], z2,
                preferred_element_type=jnp.float32)
        + w_ref[R_C2:R_C2 + H2, H1_HALF * f:H1_HALF * f + 1], 0.0)       # (H2, B*D)

    # --- CIN output head on the MXU: (1,16)@(16,B*D), then per-sample D-sum ---
    hi_cat = jnp.concatenate([x1, hi2], axis=0)                          # (H1+H2, B*D)
    acc = jnp.dot(w_ref[R_HEAD:R_HEAD + 1, 0:H1 + H2], hi_cat,
                  preferred_element_type=jnp.float32)                    # (1, B*D)
    cin = jnp.dot(acc, seg_ref[...], preferred_element_type=jnp.float32)  # (1, B)

    # --- deep MLP (transposed, eval-BN folded); linear part = matmul row DEEP1 ---
    d_all = jnp.dot(w_ref[R_D1:R_D1 + N_D1, :], xT,
                    preferred_element_type=jnp.float32)                  # (40, B)
    y1 = jnp.maximum(d_all[0:DEEP1, :]
                     + w_ref[R_D2:R_D2 + DEEP1, DEEP1:DEEP1 + 1], 0.0)   # (DEEP1, B)
    lin = d_all[DEEP1:DEEP1 + 1, :]                                      # (1, B)  (head-scaled)
    y2 = jnp.maximum(
        jnp.dot(w_ref[R_D2:R_D2 + DEEP2, 0:DEEP1], y1,
                preferred_element_type=jnp.float32)
        + w_ref[R_D2:R_D2 + DEEP2, DEEP1 + 1:DEEP1 + 2], 0.0)            # (DEEP2, B)
    deep = jnp.dot(w_ref[R_HEAD + 1:R_HEAD + 2, 0:DEEP2], y2,
                   preferred_element_type=jnp.float32)                   # (1, B)

    out_ref[...] = cin + lin + deep + w_ref[R_HEAD + 2:R_HEAD + 3, 0:1]  # (1, B)


# ------------------------------------------------------------------
# Parameter init (deterministic, xavier-uniform-like)
# ------------------------------------------------------------------
def init_params(key):
    ks = jax.random.split(key, 20)

    def xavier(k, shape, fan_in, fan_out):
        limit = float(np.sqrt(6.0 / (fan_in + fan_out)))
        return jax.random.uniform(k, shape, jnp.float32, -limit, limit)

    p = {}
    p["emb_table"] = xavier(ks[0], (NUM_FEAT, EMB), NUM_FEAT, EMB)
    p["w_lin"] = xavier(ks[1], (INPUT_DIM, 1), INPUT_DIM, 1)
    p["b_lin"] = jax.random.normal(ks[2], (1, 1), jnp.float32) * 0.01
    p["w_c1"] = xavier(ks[3], (H1, NUM_FIELD * NUM_FIELD), NUM_FIELD * NUM_FIELD, H1)
    p["b_c1"] = jax.random.normal(ks[4], (H1, 1), jnp.float32) * 0.01
    p["w_c2"] = xavier(ks[5], (H2, NUM_FIELD * H1_HALF), NUM_FIELD * H1_HALF, H2)
    p["b_c2"] = jax.random.normal(ks[6], (H2, 1), jnp.float32) * 0.01
    p["w_d1"] = xavier(ks[7], (INPUT_DIM, DEEP1), INPUT_DIM, DEEP1)
    p["b_d1"] = jax.random.normal(ks[8], (1, DEEP1), jnp.float32) * 0.01
    p["gamma1"] = jax.random.uniform(ks[9], (1, DEEP1), jnp.float32, 0.5, 1.5)
    p["beta1"] = jax.random.normal(ks[10], (1, DEEP1), jnp.float32) * 0.1
    p["mean1"] = jnp.zeros((1, DEEP1), jnp.float32)
    p["var1"] = jnp.ones((1, DEEP1), jnp.float32)
    p["w_d2"] = xavier(ks[11], (DEEP1, DEEP2), DEEP1, DEEP2)
    p["b_d2"] = jax.random.normal(ks[12], (1, DEEP2), jnp.float32) * 0.01
    p["gamma2"] = jax.random.uniform(ks[13], (1, DEEP2), jnp.float32, 0.5, 1.5)
    p["beta2"] = jax.random.normal(ks[14], (1, DEEP2), jnp.float32) * 0.1
    p["mean2"] = jnp.zeros((1, DEEP2), jnp.float32)
    p["var2"] = jnp.ones((1, DEEP2), jnp.float32)
    out_in = 1 + FC_INPUT_DIM + DEEP2
    p["w_out"] = xavier(ks[15], (1, out_in), out_in, 1)
    p["b_out"] = jax.random.normal(ks[16], (1, 1), jnp.float32) * 0.01
    return p


# ------------------------------------------------------------------
# One-time parameter packing (hoisted out of the per-call path).
# ------------------------------------------------------------------
def prepare_params(params, batch):
    # eval-mode BN folded into the transposed deep weights/biases
    bn1_s = params["gamma1"] / jnp.sqrt(params["var1"] + BN_EPS)          # (1, DEEP1)
    bn1_b = params["beta1"] - params["mean1"] * bn1_s
    bn2_s = params["gamma2"] / jnp.sqrt(params["var2"] + BN_EPS)
    bn2_b = params["beta2"] - params["mean2"] * bn2_s
    w_d1f = params["w_d1"].T * bn1_s.T                                    # (DEEP1, F*D)
    b_d1f = (bn1_s * params["b_d1"] + bn1_b).reshape(-1)                  # (DEEP1,)
    w_d2f = params["w_d2"].T * bn2_s.T                                    # (DEEP2, DEEP1)
    b_d2f = (bn2_s * params["b_d2"] + bn2_b).reshape(-1)                  # (DEEP2,)

    # split output-layer weight over its concat blocks: [linear | hi1 | hi2 | deep]
    w_out = params["w_out"][0]                                            # (45,)
    w_o_lin = w_out[0]
    w_o_r1 = w_out[1:1 + H1_HALF]                                         # (4,)
    w_o_r2 = w_out[1 + H1_HALF:1 + FC_INPUT_DIM]                          # (8,)
    w_o_deep = w_out[1 + FC_INPUT_DIM:]                                   # (32,)
    c0 = params["b_out"][0, 0] + params["b_lin"][0, 0] * w_o_lin          # scalar

    slab = jnp.zeros((SLAB_ROWS, 128), jnp.float32)
    slab = slab.at[R_D1:R_D1 + DEEP1, :].set(w_d1f)
    slab = slab.at[R_D1 + DEEP1, :].set(params["w_lin"].reshape(-1) * w_o_lin)
    slab = slab.at[R_C1:R_C1 + H1, 0:NUM_FIELD * NUM_FIELD].set(params["w_c1"])
    slab = slab.at[R_C1:R_C1 + H1, NUM_FIELD * NUM_FIELD].set(params["b_c1"].reshape(-1))
    slab = slab.at[R_C2:R_C2 + H2, 0:H1_HALF * NUM_FIELD].set(params["w_c2"])
    slab = slab.at[R_C2:R_C2 + H2, H1_HALF * NUM_FIELD].set(params["b_c2"].reshape(-1))
    slab = slab.at[R_D2:R_D2 + DEEP2, 0:DEEP1].set(w_d2f)
    slab = slab.at[R_D2:R_D2 + DEEP1, DEEP1].set(b_d1f)
    slab = slab.at[R_D2:R_D2 + DEEP2, DEEP1 + 1].set(b_d2f)
    head_cin = jnp.concatenate([jnp.zeros((H1_HALF,), jnp.float32), w_o_r1, w_o_r2])
    slab = slab.at[R_HEAD, 0:H1 + H2].set(head_cin)
    slab = slab.at[R_HEAD + 1, 0:DEEP2].set(w_o_deep)
    slab = slab.at[R_HEAD + 2, 0].set(c0)

    # constant per-sample D-sum (segment-sum) matrix: seg[b*D+d, b] = 1
    ridx = np.arange(batch * EMB)[:, None]
    cidx = np.arange(batch)[None, :]
    seg = jnp.asarray((ridx // EMB == cidx).astype(np.float32))           # (B*D, B)

    return {"emb_table": params["emb_table"], "w_slab": slab, "seg": seg}


# ------------------------------------------------------------------
# Per-call wrapper: gather + one transpose + pallas_call.
# ------------------------------------------------------------------
def xdeepfm_forward(feat_index, packed):
    b = feat_index.shape[0]
    emb_t = packed["emb_table"][feat_index.T]                             # (F, B, D) gather
    emb_fbd = emb_t.reshape(NUM_FIELD, b * EMB)                           # (F, B*D)  pure reshape
    emb_fdb = jnp.transpose(emb_t, (0, 2, 1)).reshape(INPUT_DIM, b)       # (F*D, B)  one transpose

    inputs = (emb_fbd, emb_fdb, packed["w_slab"], packed["seg"])
    in_specs = [pl.BlockSpec(a.shape, lambda i: (0, 0)) for a in inputs]  # full 2-D blocks

    out = pl.pallas_call(
        xdeepfm_kernel,
        out_shape=jax.ShapeDtypeStruct((1, b), jnp.float32),
        grid=(1,),
        in_specs=in_specs,
        out_specs=pl.BlockSpec((1, b), lambda i: (0, 0)),
        compiler_params=pltpu.CompilerParams(dimension_semantics=("arbitrary",)),
    )(*inputs)
    return out.reshape(b, 1)


# ------------------------------------------------------------------
# Pure-JAX reference (mirrors the torch forward, concat form)
# ------------------------------------------------------------------
def xdeepfm_reference(feat_index, params):
    emb = params["emb_table"][feat_index]            # (B, F, D)
    b = emb.shape[0]
    x2d = emb.reshape(b, INPUT_DIM)
    linear_part = x2d @ params["w_lin"] + params["b_lin"]             # (B, 1)

    x0 = emb
    z1 = jnp.einsum("bhd,bmd->bhmd", x0, x0).reshape(b, NUM_FIELD * NUM_FIELD, EMB)
    x1 = jnp.einsum("oc,bcd->bod", params["w_c1"], z1) + params["b_c1"][None]
    x1 = jnp.maximum(x1, 0.0)
    next_h, hi1 = x1[:, :H1_HALF], x1[:, H1_HALF:]
    z2 = jnp.einsum("bhd,bmd->bhmd", next_h, x0).reshape(b, H1_HALF * NUM_FIELD, EMB)
    hi2 = jnp.maximum(
        jnp.einsum("oc,bcd->bod", params["w_c2"], z2) + params["b_c2"][None], 0.0
    )
    res = jnp.concatenate([hi1, hi2], axis=1).sum(axis=2)             # (B, FC_INPUT_DIM)

    bn1_s = params["gamma1"] / jnp.sqrt(params["var1"] + BN_EPS)
    bn1_b = params["beta1"] - params["mean1"] * bn1_s
    bn2_s = params["gamma2"] / jnp.sqrt(params["var2"] + BN_EPS)
    bn2_b = params["beta2"] - params["mean2"] * bn2_s
    y = jnp.maximum((x2d @ params["w_d1"] + params["b_d1"]) * bn1_s + bn1_b, 0.0)
    y = jnp.maximum((y @ params["w_d2"] + params["b_d2"]) * bn2_s + bn2_b, 0.0)

    concat = jnp.concatenate([linear_part, res, y], axis=1)           # (B, 45)
    return concat @ params["w_out"].T + params["b_out"]               # (B, 1)


if __name__ == "__main__":
    key = jax.random.PRNGKey(0)
    pkey, ikey, vkey = jax.random.split(key, 3)
    params = init_params(pkey)
    feat_index = jax.random.randint(
        ikey, (BATCH, NUM_FIELD), 0, NUM_FEAT, dtype=jnp.int32
    )
    # feat_value is part of the torch interface but unused by its forward()
    feat_value = jax.random.uniform(vkey, (BATCH, NUM_FIELD), jnp.float32)

    # one-time parameter packing (outside the per-call path)
    packed = prepare_params(params, BATCH)
    packed = jax.tree_util.tree_map(jax.block_until_ready, packed)

    out = jax.jit(xdeepfm_forward)(feat_index, packed)
    out = jax.block_until_ready(out)

    ref = xdeepfm_reference(feat_index, params)
    np.testing.assert_allclose(np.asarray(out), np.asarray(ref), rtol=1e-4, atol=1e-4)
    print("KERNEL_OK")
</pallas_src>

<mosaic_0001>
module attributes {stable_mosaic.version = 11 : i64} {
  func.func @xdeepfm_kernel(%arg0: i32, %arg1: memref<8x128xf32, #tpu.memory_space<vmem>>, %arg2: memref<128x8xf32, #tpu.memory_space<vmem>>, %arg3: memref<96x128xf32, #tpu.memory_space<vmem>>, %arg4: memref<128x8xf32, #tpu.memory_space<vmem>>, %arg5: memref<1x8xf32, #tpu.memory_space<vmem>>) attributes {dimension_semantics = [#tpu.dimension_semantics<arbitrary>], iteration_bounds = array<i64: 1>, scalar_prefetch = 0 : i64, scratch_operands = 0 : i64, tpu.core_type = #tpu.core_type<tc>, window_params = [{pipeline_mode = #tpu.pipeline_mode<synchronous>, transform_indices = @transform_0, window_bounds = array<i64: 8, 128>}, {pipeline_mode = #tpu.pipeline_mode<synchronous>, transform_indices = @transform_1, window_bounds = array<i64: 128, 8>}, {pipeline_mode = #tpu.pipeline_mode<synchronous>, transform_indices = @transform_2, window_bounds = array<i64: 96, 128>}, {pipeline_mode = #tpu.pipeline_mode<synchronous>, transform_indices = @transform_3, window_bounds = array<i64: 128, 8>}, {pipeline_mode = #tpu.pipeline_mode<synchronous>, transform_indices = @transform_4, window_bounds = array<i64: 1, 8>}]} {
    %c0 = arith.constant 0 : index
    %c0_0 = arith.constant 0 : index
    %0 = vector.load %arg1[%c0, %c0_0] : memref<8x128xf32, #tpu.memory_space<vmem>>, vector<8x128xf32>
    %c0_1 = arith.constant 0 : index
    %c0_2 = arith.constant 0 : index
    %1 = vector.load %arg2[%c0_1, %c0_2] : memref<128x8xf32, #tpu.memory_space<vmem>>, vector<128x8xf32>
    %2 = vector.shape_cast %0 : vector<8x128xf32> to vector<8x1x128xf32>
    %3 = vector.shape_cast %0 : vector<8x128xf32> to vector<1x8x128xf32>
    %4 = vector.broadcast %2 : vector<8x1x128xf32> to vector<8x8x128xf32>
    %5 = vector.broadcast %3 : vector<1x8x128xf32> to vector<8x8x128xf32>
    %6 = arith.mulf %4, %5 : vector<8x8x128xf32>
    %7 = vector.shape_cast %6 : vector<8x8x128xf32> to vector<64x128xf32>
    %c40 = arith.constant 40 : index
    %c0_3 = arith.constant 0 : index
    %8 = vector.load %arg3[%c40, %c0_3] : memref<96x128xf32, #tpu.memory_space<vmem>>, vector<8x64xf32>
    %cst = arith.constant dense<0.000000e+00> : vector<8x128xf32>
    %9 = tpu.matmul %8, %7, %cst {dimension_numbers = #tpu.dot_dimension_numbers<[1], [0], [0], [1], [0, 0, 1, 1], [], []>} : vector<8x64xf32>, vector<64x128xf32>, vector<8x128xf32> -> vector<8x128xf32>
    %c40_4 = arith.constant 40 : index
    %c64 = arith.constant 64 : index
    %10 = vector.load %arg3[%c40_4, %c64] : memref<96x128xf32, #tpu.memory_space<vmem>>, vector<8x1xf32>
    %11 = vector.broadcast %10 : vector<8x1xf32> to vector<8x128xf32>
    %12 = arith.addf %9, %11 : vector<8x128xf32>
    %cst_5 = arith.constant 0.000000e+00 : f32
    %13 = vector.broadcast %cst_5 : f32 to vector<8x128xf32>
    %14 = arith.maximumf %12, %13 : vector<8x128xf32>
    %15 = vector.extract_strided_slice %14 {offsets = [0, 0], sizes = [4, 128], strides = [1, 1]} : vector<8x128xf32> to vector<4x128xf32>
    %16 = vector.shape_cast %15 : vector<4x128xf32> to vector<4x1x128xf32>
    %17 = vector.shape_cast %0 : vector<8x128xf32> to vector<1x8x128xf32>
    %18 = vector.broadcast %16 : vector<4x1x128xf32> to vector<4x8x128xf32>
    %19 = vector.broadcast %17 : vector<1x8x128xf32> to vector<4x8x128xf32>
    %20 = arith.mulf %18, %19 : vector<4x8x128xf32>
    %21 = vector.shape_cast %20 : vector<4x8x128xf32> to vector<32x128xf32>
    %c48 = arith.constant 48 : index
    %c0_6 = arith.constant 0 : index
    %22 = vector.load %arg3[%c48, %c0_6] : memref<96x128xf32, #tpu.memory_space<vmem>>, vector<8x32xf32>
    %cst_7 = arith.constant dense<0.000000e+00> : vector<8x128xf32>
    %23 = tpu.matmul %22, %21, %cst_7 {dimension_numbers = #tpu.dot_dimension_numbers<[1], [0], [0], [1], [0, 0, 1, 1], [], []>} : vector<8x32xf32>, vector<32x128xf32>, vector<8x128xf32> -> vector<8x128xf32>
    %c48_8 = arith.constant 48 : index
    %c32 = arith.constant 32 : index
    %24 = vector.load %arg3[%c48_8, %c32] : memref<96x128xf32, #tpu.memory_space<vmem>>, vector<8x1xf32>
    %25 = vector.broadcast %24 : vector<8x1xf32> to vector<8x128xf32>
    %26 = arith.addf %23, %25 : vector<8x128xf32>
    %cst_9 = arith.constant 0.000000e+00 : f32
    %27 = vector.broadcast %cst_9 : f32 to vector<8x128xf32>
    %28 = arith.maximumf %26, %27 : vector<8x128xf32>
    %29 = tpu.concatenate %14, %28 in 0 : vector<8x128xf32>, vector<8x128xf32> -> vector<16x128xf32>
    %c88 = arith.constant 88 : index
    %c0_10 = arith.constant 0 : index
    %30 = vector.load %arg3[%c88, %c0_10] : memref<96x128xf32, #tpu.memory_space<vmem>>, vector<1x16xf32>
    %cst_11 = arith.constant dense<0.000000e+00> : vector<1x128xf32>
    %31 = tpu.matmul %30, %29, %cst_11 {dimension_numbers = #tpu.dot_dimension_numbers<[1], [0], [0], [1], [0, 0, 1, 1], [], []>} : vector<1x16xf32>, vector<16x128xf32>, vector<1x128xf32> -> vector<1x128xf32>
    %c0_12 = arith.constant 0 : index
    %c0_13 = arith.constant 0 : index
    %32 = vector.load %arg4[%c0_12, %c0_13] : memref<128x8xf32, #tpu.memory_space<vmem>>, vector<128x8xf32>
    %cst_14 = arith.constant dense<0.000000e+00> : vector<1x8xf32>
    %33 = tpu.matmul %31, %32, %cst_14 {dimension_numbers = #tpu.dot_dimension_numbers<[1], [0], [0], [1], [0, 0, 1, 1], [], []>} : vector<1x128xf32>, vector<128x8xf32>, vector<1x8xf32> -> vector<1x8xf32>
    %c0_15 = arith.constant 0 : index
    %c0_16 = arith.constant 0 : index
    %34 = vector.load %arg3[%c0_15, %c0_16] : memref<96x128xf32, #tpu.memory_space<vmem>>, vector<40x128xf32>
    %cst_17 = arith.constant dense<0.000000e+00> : vector<40x8xf32>
    %35 = tpu.matmul %34, %1, %cst_17 {dimension_numbers = #tpu.dot_dimension_numbers<[1], [0], [0], [1], [0, 0, 1, 1], [], []>} : vector<40x128xf32>, vector<128x8xf32>, vector<40x8xf32> -> vector<40x8xf32>
    %36 = vector.extract_strided_slice %35 {offsets = [0, 0], sizes = [32, 8], strides = [1, 1]} : vector<40x8xf32> to vector<32x8xf32>
    %c56 = arith.constant 56 : index
    %c32_18 = arith.constant 32 : index
    %37 = vector.load %arg3[%c56, %c32_18] : memref<96x128xf32, #tpu.memory_space<vmem>>, vector<32x1xf32>
    %38 = vector.broadcast %37 : vector<32x1xf32> to vector<32x8xf32>
    %39 = arith.addf %36, %38 : vector<32x8xf32>
    %cst_19 = arith.constant 0.000000e+00 : f32
    %40 = vector.broadcast %cst_19 : f32 to vector<32x8xf32>
    %41 = arith.maximumf %39, %40 : vector<32x8xf32>
    %42 = vector.extract_strided_slice %35 {offsets = [32, 0], sizes = [1, 8], strides = [1, 1]} : vector<40x8xf32> to vector<1x8xf32>
    %c56_20 = arith.constant 56 : index
    %c0_21 = arith.constant 0 : index
    %43 = vector.load %arg3[%c56_20, %c0_21] : memref<96x128xf32, #tpu.memory_space<vmem>>, vector<32x32xf32>
    %cst_22 = arith.constant dense<0.000000e+00> : vector<32x8xf32>
    %44 = tpu.matmul %43, %41, %cst_22 {dimension_numbers = #tpu.dot_dimension_numbers<[1], [0], [0], [1], [0, 0, 1, 1], [], []>} : vector<32x32xf32>, vector<32x8xf32>, vector<32x8xf32> -> vector<32x8xf32>
    %c56_23 = arith.constant 56 : index
    %c33 = arith.constant 33 : index
    %45 = vector.load %arg3[%c56_23, %c33] : memref<96x128xf32, #tpu.memory_space<vmem>>, vector<32x1xf32>
    %46 = vector.broadcast %45 : vector<32x1xf32> to vector<32x8xf32>
    %47 = arith.addf %44, %46 : vector<32x8xf32>
    %cst_24 = arith.constant 0.000000e+00 : f32
    %48 = vector.broadcast %cst_24 : f32 to vector<32x8xf32>
    %49 = arith.maximumf %47, %48 : vector<32x8xf32>
    %c89 = arith.constant 89 : index
    %c0_25 = arith.constant 0 : index
    %50 = vector.load %arg3[%c89, %c0_25] : memref<96x128xf32, #tpu.memory_space<vmem>>, vector<1x32xf32>
    %cst_26 = arith.constant dense<0.000000e+00> : vector<1x8xf32>
    %51 = tpu.matmul %50, %49, %cst_26 {dimension_numbers = #tpu.dot_dimension_numbers<[1], [0], [0], [1], [0, 0, 1, 1], [], []>} : vector<1x32xf32>, vector<32x8xf32>, vector<1x8xf32> -> vector<1x8xf32>
    %52 = arith.addf %33, %42 : vector<1x8xf32>
    %53 = arith.addf %52, %51 : vector<1x8xf32>
    %c90 = arith.constant 90 : index
    %c0_27 = arith.constant 0 : index
    %54 = vector.load %arg3[%c90, %c0_27] : memref<96x128xf32, #tpu.memory_space<vmem>>, vector<1x1xf32>
    %55 = vector.broadcast %54 : vector<1x1xf32> to vector<1x8xf32>
    %56 = arith.addf %53, %55 : vector<1x8xf32>
    %c0_28 = arith.constant 0 : index
    %c0_29 = arith.constant 0 : index
    %57 = vector.load %arg5[%c0_28, %c0_29] : memref<1x8xf32, #tpu.memory_space<vmem>>, vector<1x8xf32>
    tpu.vector_store %arg5[%c0_28, %c0_29], %56 {strides = array<i32>} : memref<1x8xf32, #tpu.memory_space<vmem>>, vector<1x8xf32>,
    return
  }
  func.func @transform_0(%arg0: i32) -> (i32, i32) {
    %c0_i32 = arith.constant 0 : i32
    %c0_i32_0 = arith.constant 0 : i32
    %c0_i32_1 = arith.constant 0 : i32
    return %c0_i32, %c0_i32_0 : i32, i32
  }
  func.func @transform_1(%arg0: i32) -> (i32, i32) {
    %c0_i32 = arith.constant 0 : i32
    %c0_i32_0 = arith.constant 0 : i32
    %c0_i32_1 = arith.constant 0 : i32
    return %c0_i32, %c0_i32_0 : i32, i32
  }
  func.func @transform_2(%arg0: i32) -> (i32, i32) {
    %c0_i32 = arith.constant 0 : i32
    %c0_i32_0 = arith.constant 0 : i32
    %c0_i32_1 = arith.constant 0 : i32
    return %c0_i32, %c0_i32_0 : i32, i32
  }
  func.func @transform_3(%arg0: i32) -> (i32, i32) {
    %c0_i32 = arith.constant 0 : i32
    %c0_i32_0 = arith.constant 0 : i32
    %c0_i32_1 = arith.constant 0 : i32
    return %c0_i32, %c0_i32_0 : i32, i32
  }
  func.func @transform_4(%arg0: i32) -> (i32, i32) {
    %c0_i32 = arith.constant 0 : i32
    %c0_i32_0 = arith.constant 0 : i32
    %c0_i32_1 = arith.constant 0 : i32
    return %c0_i32, %c0_i32_0 : i32, i32
  }
}

</mosaic_0001>

<llo_original>
// kernel: xdeepfm_forward.1
$region0: #{xdeepfm_forward.1}
  #allocation0 [shape = 'u32[]', space=smem, size = 0x4, offset = 0x4, fixed_abs, tag = 'smem constant byte address 0x4 - core index']
  #allocation1 [shape = 'u32[144,128]{1,0:T(1,128)}', space=vmem, size = 0x12000, scoped, tag = 'internal scratch']
  %s0 = inlined_call_operand.vmem [shape: f32[8,128], index: 0, kind: input, shape index: {}]
  %s1 = inlined_call_operand.vmem [shape: f32[128,8], index: 1, kind: input, shape index: {}]
  %s2 = inlined_call_operand.vmem [shape: f32[96,128], index: 2, kind: input, shape index: {}]
  %s3 = inlined_call_operand.vmem [shape: f32[128,8], index: 3, kind: input, shape index: {}]
  %s4 = inlined_call_operand.hbm [shape: f32[1,8], index: 4, kind: output, shape index: {}]
  %s5 = sld [smem:[#allocation0]]
  $region26: #{xdeepfm_forward.1} parent=0
    _
  %s7 = ssub.s32 1, %s5
  %s8 = scalar_select 0, %s7, %s5
  $region1: #{xdeepfm_forward.1} parent=0
    #allocation2 [shape = 'u8[512]{0}', space=vmem, size = 0x400, scoped, tag = 'output window, operand 0, single buffered']
    #allocation3 [shape = 's32[1]{0}', space=sflag, size = 0x4, scoped, tag = 'scoped memory for xdeepfm_forward.1']
    %9 = vsyncpa [#allocation3], 0
    // Predicated region
    $region2: #{xdeepfm_forward.1} parent=1 // pred_check
      _
    $region3: #{xdeepfm_forward.1} parent=1 // pred_check_branch
      %11 = sbr.rel (0) target = $region5
    $region4: #{xdeepfm_forward.1} parent=1 // pred_region
      _
    $region5: #{xdeepfm_forward.1} parent=1 // pred_fallthru
      _
    // Predicated region
    $region6: #{xdeepfm_forward.1} parent=1 // pred_check
      _
    $region7: #{xdeepfm_forward.1} parent=1 // pred_check_branch
      %13 = sbr.rel (0) target = $region9
    $region8: #{xdeepfm_forward.1} parent=1 // pred_region
      _
    $region9: #{xdeepfm_forward.1} parent=1 // pred_fallthru
      _
    // Predicated region
    $region10: #{xdeepfm_forward.1} parent=1 // pred_check
      _
    $region11: #{xdeepfm_forward.1} parent=1 // pred_check_branch
      %15 = sbr.rel (0) target = $region13
    $region12: #{xdeepfm_forward.1} parent=1 // pred_region
      _
    $region13: #{xdeepfm_forward.1} parent=1 // pred_fallthru
      _
    // Predicated region
    $region14: #{xdeepfm_forward.1} parent=1 // pred_check
      _
    $region15: #{xdeepfm_forward.1} parent=1 // pred_check_branch
      %17 = sbr.rel (0) target = $region17
    $region16: #{xdeepfm_forward.1} parent=1 // pred_region
      _
    $region17: #{xdeepfm_forward.1} parent=1 // pred_fallthru
      _
    %v18 = vld [vmem:[%s0] sm:$0xff]
    %v19 = vld [vmem:[%s1] sm:$0xff]
    %v20 = vld [vmem:[%s1 + $0x8] sm:$0xff]
    %v21 = vld [vmem:[%s1 + $0x10] sm:$0xff]
    %v22 = vld [vmem:[%s1 + $0x18] sm:$0xff]
    %v23 = vld [vmem:[%s1 + $0x20] sm:$0xff]
    %v24 = vld [vmem:[%s1 + $0x28] sm:$0xff]
    %v25 = vld [vmem:[%s1 + $0x30] sm:$0xff]
    %v26 = vld [vmem:[%s1 + $0x38] sm:$0xff]
    %v27 = vld [vmem:[%s1 + $0x40] sm:$0xff]
    %v28 = vld [vmem:[%s1 + $0x48] sm:$0xff]
    %v29 = vld [vmem:[%s1 + $0x50] sm:$0xff]
    %v30 = vld [vmem:[%s1 + $0x58] sm:$0xff]
    %v31 = vld [vmem:[%s1 + $0x60] sm:$0xff]
    %v32 = vld [vmem:[%s1 + $0x68] sm:$0xff]
    %v33 = vld [vmem:[%s1 + $0x70] sm:$0xff]
    %v34 = vld [vmem:[%s1 + $0x78] sm:$0xff]
    %v36 = vcombine.high %v18, %v18
    %v38 = vunpack.c.l.s4 1966171168
    %v39 = vunpack.c.0.s8 %v38
    %v40 = vlaneseq
    %v41 = vshrl.u32 %v40, 7
    %v42 = vsub.s32 %v39, %v41
    %v43 = vrot.slane %v18, %v42
    %v45 = vunpack.c.l.s4 1966171168
    %v46 = vunpack.c.0.s8 %v45
    %v47 = vlaneseq
    %v48 = vshrl.u32 %v47, 7
    %v49 = vsub.s32 %v46, %v48
    %v50 = vrot.slane %v36, %v49
    %v51 = vcombine.high %v43, %v43
    %v52 = vcombine.high %v50, %v50
    %v54 = vunpack.c.l.s4 1966171168
    %v55 = vunpack.c.0.s8 %v54
    %v56 = vlaneseq
    %v57 = vshrl.u32 %v56, 7
    %v58 = vsub.s32 %v55, %v57
    %v59 = vrot.slane %v43, %v58
    %v61 = vunpack.c.l.s4 1966171168
    %v62 = vunpack.c.0.s8 %v61
    %v63 = vlaneseq
    %v64 = vshrl.u32 %v63, 7
    %v65 = vsub.s32 %v62, %v64
    %v66 = vrot.slane %v50, %v65
    %v68 = vunpack.c.l.s4 1966171168
    %v69 = vunpack.c.0.s8 %v68
    %v70 = vlaneseq
    %v71 = vshrl.u32 %v70, 7
    %v72 = vsub.s32 %v69, %v71
    %v73 = vrot.slane %v51, %v72
    %v75 = vunpack.c.l.s4 1966171168
    %v76 = vunpack.c.0.s8 %v75
    %v77 = vlaneseq
    %v78 = vshrl.u32 %v77, 7
    %v79 = vsub.s32 %v76, %v78
    %v80 = vrot.slane %v52, %v79
    %v81 = vcombine.high %v59, %v59
    %v82 = vcombine.high %v66, %v66
    %v83 = vcombine.high %v73, %v73
    %v84 = vcombine.high %v80, %v80
    %v85 = vlaneseq
    %v86 = vshrl.u32 %v85, 7
    %v87 = vsub.s32 0, %v86
    %v88 = vrot.slane %v59, %v87
    %v89 = vlaneseq
    %v90 = vshrl.u32 %v89, 7
    %v91 = vsub.s32 0, %v90
    %v92 = vrot.slane %v73, %v91
    %v93 = vlaneseq
    %v94 = vshrl.u32 %v93, 7
    %v95 = vsub.s32 0, %v94
    %v96 = vrot.slane %v81, %v95
    %v97 = vlaneseq
    %v98 = vshrl.u32 %v97, 7
    %v99 = vsub.s32 0, %v98
    %v100 = vrot.slane %v83, %v99
    %v101 = vlaneseq
    %v102 = vshrl.u32 %v101, 7
    %v103 = vsub.s32 0, %v102
    %v104 = vrot.slane %v66, %v103
    %v105 = vlaneseq
    %v106 = vshrl.u32 %v105, 7
    %v107 = vsub.s32 0, %v106
    %v108 = vrot.slane %v80, %v107
    %v109 = vlaneseq
    %v110 = vshrl.u32 %v109, 7
    %v111 = vsub.s32 0, %v110
    %v112 = vrot.slane %v82, %v111
    %v113 = vlaneseq
    %v114 = vshrl.u32 %v113, 7
    %v115 = vsub.s32 0, %v114
    %v116 = vrot.slane %v84, %v115
    %v125 = vmul.f32 %v88, %v18
    %v126 = vmul.f32 %v92, %v18
    %v127 = vmul.f32 %v96, %v18
    %v128 = vmul.f32 %v100, %v18
    %v129 = vmul.f32 %v104, %v18
    %v130 = vmul.f32 %v108, %v18
    %v131 = vmul.f32 %v112, %v18
    %v132 = vmul.f32 %v116, %v18
    %v133 = vld [vmem:[%s2 + $0x28] sm:$0xff]
    %135 = vset.pattern.permute.xlu0 64
    %136 = vperm.xlu0 %135, %v133
    %v137 = vpop.permute.xlu0 %136
    %vm139 = vcmask 523264
    %v140 = vsel %vm139, %v133, 0
    %142 = vmatprep.subr.mxu0 0.0
    %143 = vmatpush1.msra.mxu0 %v125
    %144 = vmatprep.subr.mxu0 0.0
    %145 = vmatpush1.msra.mxu0 %v126
    %146 = vmatprep.subr.mxu0 0.0
    %147 = vmatpush1.msra.mxu0 %v127
    %148 = vmatprep.subr.mxu0 0.0
    %149 = vmatpush1.msra.mxu0 %v128
    %150 = vmatprep.subr.mxu0 0.0
    %151 = vmatpush1.msra.mxu0 %v129
    %152 = vmatprep.subr.mxu0 0.0
    %153 = vmatpush1.msra.mxu0 %v130
    %154 = vmatprep.subr.mxu0 0.0
    %155 = vmatpush1.msra.mxu0 %v131
    %156 = vmatprep.subr.mxu0 0.0
    %157 = vmatpush1.msra.mxu0 %v132
    %158 = vmatprep.subr.mxu0 0.0
    %159 = vmatpush1.msra.mxu0 0.0
    %160 = vmatprep.subr.mxu0 0.0
    %161 = vmatpush1.msra.mxu0 0.0
    %162 = vmatprep.subr.mxu0 0.0
    %163 = vmatpush1.msra.mxu0 0.0
    %164 = vmatprep.subr.mxu0 0.0
    %165 = vmatpush1.msra.mxu0 0.0
    %166 = vmatprep.subr.mxu0 0.0
    %167 = vmatpush1.msra.mxu0 0.0
    %168 = vmatprep.subr.mxu0 0.0
    %169 = vmatpush1.msra.mxu0 0.0
    %170 = vmatprep.subr.mxu0 0.0
    %171 = vmatpush1.msra.mxu0 0.0
    %172 = vmatprep.subr.mxu0 0.0
    %173 = vmatpush1.msra.mxu0 0.0
    %174 = vmatprep.subr.mxu0 0.0
    %175 = vmatpush1.msra.mxu0 0.0
    %176 = vmatprep.subr.mxu0 0.0
    %177 = vmatpush1.msra.mxu0 0.0
    %178 = vmatprep.subr.mxu0 0.0
    %179 = vmatpush1.msra.mxu0 0.0
    %180 = vmatprep.subr.mxu0 0.0
    %181 = vmatpush1.msra.mxu0 0.0
    %182 = vmatprep.subr.mxu0 0.0
    %183 = vmatpush1.msra.mxu0 0.0
    %184 = vmatprep.subr.mxu0 0.0
    %185 = vmatpush1.msra.mxu0 0.0
    %186 = vmatprep.subr.mxu0 0.0
    %187 = vmatpush1.msra.mxu0 0.0
    %188 = vmatprep.subr.mxu0 0.0
    %189 = vmatpush1.msra.mxu0 0.0
    %190 = vmatprep.subr.mxu0 0.0
    %191 = vmatpush1.msra.mxu0 0.0
    %192 = vmatprep.subr.mxu0 0.0
    %193 = vmatpush1.msra.mxu0 0.0
    %194 = vmatprep.subr.mxu0 0.0
    %195 = vmatpush1.msra.mxu0 0.0
    %196 = vmatprep.subr.mxu0 0.0
    %197 = vmatpush1.msra.mxu0 0.0
    %198 = vmatprep.subr.mxu0 0.0
    %199 = vmatpush1.msra.mxu0 0.0
    %200 = vmatprep.subr.mxu0 0.0
    %201 = vmatpush1.msra.mxu0 0.0
    %202 = vmatprep.subr.mxu0 0.0
    %203 = vmatpush1.msra.mxu0 0.0
    %204 = vmatprep.subr.mxu0 0.0
    %205 = vmatpush1.msra.mxu0 0.0
    %206 = vmatprep.mubr.f32.mxu0 0.0
    %207 = vmatmul.mubr.f32.gmra.mrb[0].mxu0 %v140
    %v208 = vpop.f32.mrb[0].mxu0
    %v209 = vadd.f32 %v137, %v208
    %v210 = vpop.f32.mrb[0].mxu0
    %211 = vdwg.mxu0
    %v212 = vmax.f32 %v209, 0.0
    %v215 = vunpack.c.l.s4 1966171168
    %v216 = vunpack.c.0.s8 %v215
    %v217 = vlaneseq
    %v218 = vshrl.u32 %v217, 7
    %v219 = vsub.s32 %v216, %v218
    %v220 = vrot.slane %v212, %v219
    %v221 = vcombine.high %v220, %v220
    %v223 = vunpack.c.l.s4 1966171168
    %v224 = vunpack.c.0.s8 %v223
    %v225 = vlaneseq
    %v226 = vshrl.u32 %v225, 7
    %v227 = vsub.s32 %v224, %v226
    %v228 = vrot.slane %v220, %v227
    %v230 = vunpack.c.l.s4 1966171168
    %v231 = vunpack.c.0.s8 %v230
    %v232 = vlaneseq
    %v233 = vshrl.u32 %v232, 7
    %v234 = vsub.s32 %v231, %v233
    %v235 = vrot.slane %v221, %v234
    %v236 = vcombine.high %v228, %v228
    %v237 = vcombine.high %v235, %v235
    %v238 = vlaneseq
    %v239 = vshrl.u32 %v238, 7
    %v240 = vsub.s32 0, %v239
    %v241 = vrot.slane %v228, %v240
    %v242 = vlaneseq
    %v243 = vshrl.u32 %v242, 7
    %v244 = vsub.s32 0, %v243
    %v245 = vrot.slane %v235, %v244
    %v246 = vlaneseq
    %v247 = vshrl.u32 %v246, 7
    %v248 = vsub.s32 0, %v247
    %v249 = vrot.slane %v236, %v248
    %v250 = vlaneseq
    %v251 = vshrl.u32 %v250, 7
    %v252 = vsub.s32 0, %v251
    %v253 = vrot.slane %v237, %v252
    %v258 = vmul.f32 %v241, %v18
    %v259 = vmul.f32 %v245, %v18
    %v260 = vmul.f32 %v249, %v18
    %v261 = vmul.f32 %v253, %v18
    %v262 = vld [vmem:[%s2 + $0x30] sm:$0xff]
    %264 = vset.pattern.permute.xlu0 32
    %265 = vperm.xlu0 %264, %v262
    %v266 = vpop.permute.xlu0 %265
    %vm268 = vcmask 261120
    %v269 = vsel %vm268, %v262, 0
    %271 = vmatprep.subr.mxu0 0.0
    %272 = vmatpush1.msra.mxu0 %v258
    %273 = vmatprep.subr.mxu0 0.0
    %274 = vmatpush1.msra.mxu0 %v259
    %275 = vmatprep.subr.mxu0 0.0
    %276 = vmatpush1.msra.mxu0 %v260
    %277 = vmatprep.subr.mxu0 0.0
    %278 = vmatpush1.msra.mxu0 %v261
    %279 = vmatprep.subr.mxu0 0.0
    %280 = vmatpush1.msra.mxu0 0.0
    %281 = vmatprep.subr.mxu0 0.0
    %282 = vmatpush1.msra.mxu0 0.0
    %283 = vmatprep.subr.mxu0 0.0
    %284 = vmatpush1.msra.mxu0 0.0
    %285 = vmatprep.subr.mxu0 0.0
    %286 = vmatpush1.msra.mxu0 0.0
    %287 = vmatprep.subr.mxu0 0.0
    %288 = vmatpush1.msra.mxu0 0.0
    %289 = vmatprep.subr.mxu0 0.0
    %290 = vmatpush1.msra.mxu0 0.0
    %291 = vmatprep.subr.mxu0 0.0
    %292 = vmatpush1.msra.mxu0 0.0
    %293 = vmatprep.subr.mxu0 0.0
    %294 = vmatpush1.msra.mxu0 0.0
    %295 = vmatprep.subr.mxu0 0.0
    %296 = vmatpush1.msra.mxu0 0.0
    %297 = vmatprep.subr.mxu0 0.0
    %298 = vmatpush1.msra.mxu0 0.0
    %299 = vmatprep.subr.mxu0 0.0
    %300 = vmatpush1.msra.mxu0 0.0
    %301 = vmatprep.subr.mxu0 0.0
    %302 = vmatpush1.msra.mxu0 0.0
    %303 = vmatprep.subr.mxu0 0.0
    %304 = vmatpush1.msra.mxu0 0.0
    %305 = vmatprep.subr.mxu0 0.0
    %306 = vmatpush1.msra.mxu0 0.0
    %307 = vmatprep.subr.mxu0 0.0
    %308 = vmatpush1.msra.mxu0 0.0
    %309 = vmatprep.subr.mxu0 0.0
    %310 = vmatpush1.msra.mxu0 0.0
    %311 = vmatprep.subr.mxu0 0.0
    %312 = vmatpush1.msra.mxu0 0.0
    %313 = vmatprep.subr.mxu0 0.0
    %314 = vmatpush1.msra.mxu0 0.0
    %315 = vmatprep.subr.mxu0 0.0
    %316 = vmatpush1.msra.mxu0 0.0
    %317 = vmatprep.subr.mxu0 0.0
    %318 = vmatpush1.msra.mxu0 0.0
    %319 = vmatprep.subr.mxu0 0.0
    %320 = vmatpush1.msra.mxu0 0.0
    %321 = vmatprep.subr.mxu0 0.0
    %322 = vmatpush1.msra.mxu0 0.0
    %323 = vmatprep.subr.mxu0 0.0
    %324 = vmatpush1.msra.mxu0 0.0
    %325 = vmatprep.subr.mxu0 0.0
    %326 = vmatpush1.msra.mxu0 0.0
    %327 = vmatprep.subr.mxu0 0.0
    %328 = vmatpush1.msra.mxu0 0.0
    %329 = vmatprep.subr.mxu0 0.0
    %330 = vmatpush1.msra.mxu0 0.0
    %331 = vmatprep.subr.mxu0 0.0
    %332 = vmatpush1.msra.mxu0 0.0
    %333 = vmatprep.subr.mxu0 0.0
    %334 = vmatpush1.msra.mxu0 0.0
    %335 = vmatprep.mubr.f32.mxu0 0.0
    %336 = vmatmul.mubr.f32.gmra.mrb[0].mxu0 %v269
    %v337 = vpop.f32.mrb[0].mxu0
    %v338 = vadd.f32 %v266, %v337
    %v339 = vpop.f32.mrb[0].mxu0
    %340 = vdwg.mxu0
    %v341 = vmax.f32 %v338, 0.0
    %v342 = vld [vmem:[%s2 + $0x58] sm:$0x1]
    %vm343 = vcmask 130048
    %v345 = vsel %vm343, %v342, 0
    %347 = vmatprep.subr.mxu0 0.0
    %348 = vmatpush1.msra.mxu0 %v212
    %349 = vmatprep.subr.mxu0 0.0
    %350 = vmatpush1.msra.mxu0 %v341
    %351 = vmatprep.subr.mxu0 0.0
    %352 = vmatpush1.msra.mxu0 0.0
    %353 = vmatprep.subr.mxu0 0.0
    %354 = vmatpush1.msra.mxu0 0.0
    %355 = vmatprep.subr.mxu0 0.0
    %356 = vmatpush1.msra.mxu0 0.0
    %357 = vmatprep.subr.mxu0 0.0
    %358 = vmatpush1.msra.mxu0 0.0
    %359 = vmatprep.subr.mxu0 0.0
    %360 = vmatpush1.msra.mxu0 0.0
    %361 = vmatprep.subr.mxu0 0.0
    %362 = vmatpush1.msra.mxu0 0.0
    %363 = vmatprep.subr.mxu0 0.0
    %364 = vmatpush1.msra.mxu0 0.0
    %365 = vmatprep.subr.mxu0 0.0
    %366 = vmatpush1.msra.mxu0 0.0
    %367 = vmatprep.subr.mxu0 0.0
    %368 = vmatpush1.msra.mxu0 0.0
    %369 = vmatprep.subr.mxu0 0.0
    %370 = vmatpush1.msra.mxu0 0.0
    %371 = vmatprep.subr.mxu0 0.0
    %372 = vmatpush1.msra.mxu0 0.0
    %373 = vmatprep.subr.mxu0 0.0
    %374 = vmatpush1.msra.mxu0 0.0
    %375 = vmatprep.subr.mxu0 0.0
    %376 = vmatpush1.msra.mxu0 0.0
    %377 = vmatprep.subr.mxu0 0.0
    %378 = vmatpush1.msra.mxu0 0.0
    %379 = vmatprep.subr.mxu0 0.0
    %380 = vmatpush1.msra.mxu0 0.0
    %381 = vmatprep.subr.mxu0 0.0
    %382 = vmatpush1.msra.mxu0 0.0
    %383 = vmatprep.subr.mxu0 0.0
    %384 = vmatpush1.msra.mxu0 0.0
    %385 = vmatprep.subr.mxu0 0.0
    %386 = vmatpush1.msra.mxu0 0.0
    %387 = vmatprep.subr.mxu0 0.0
    %388 = vmatpush1.msra.mxu0 0.0
    %389 = vmatprep.subr.mxu0 0.0
    %390 = vmatpush1.msra.mxu0 0.0
    %391 = vmatprep.subr.mxu0 0.0
    %392 = vmatpush1.msra.mxu0 0.0
    %393 = vmatprep.subr.mxu0 0.0
    %394 = vmatpush1.msra.mxu0 0.0
    %395 = vmatprep.subr.mxu0 0.0
    %396 = vmatpush1.msra.mxu0 0.0
    %397 = vmatprep.subr.mxu0 0.0
    %398 = vmatpush1.msra.mxu0 0.0
    %399 = vmatprep.subr.mxu0 0.0
    %400 = vmatpush1.msra.mxu0 0.0
    %401 = vmatprep.subr.mxu0 0.0
    %402 = vmatpush1.msra.mxu0 0.0
    %403 = vmatprep.subr.mxu0 0.0
    %404 = vmatpush1.msra.mxu0 0.0
    %405 = vmatprep.subr.mxu0 0.0
    %406 = vmatpush1.msra.mxu0 0.0
    %407 = vmatprep.subr.mxu0 0.0
    %408 = vmatpush1.msra.mxu0 0.0
    %409 = vmatprep.subr.mxu0 0.0
    %410 = vmatpush1.msra.mxu0 0.0
    %411 = vmatprep.mubr.f32.mxu0 0.0
    %412 = vmatmul.mubr.f32.gmra.mrb[0].mxu0 %v345
    %v413 = vpop.f32.mrb[0].mxu0
    %v414 = vadd.f32 0.0, %v413
    %v415 = vpop.f32.mrb[0].mxu0
    %416 = vdwg.mxu0
    %v417 = vld [vmem:[%s3] sm:$0xff]
    %v418 = vld [vmem:[%s3 + $0x8] sm:$0xff]
    %v419 = vld [vmem:[%s3 + $0x10] sm:$0xff]
    %v420 = vld [vmem:[%s3 + $0x18] sm:$0xff]
    %v421 = vld [vmem:[%s3 + $0x20] sm:$0xff]
    %v422 = vld [vmem:[%s3 + $0x28] sm:$0xff]
    %v423 = vld [vmem:[%s3 + $0x30] sm:$0xff]
    %v424 = vld [vmem:[%s3 + $0x38] sm:$0xff]
    %v425 = vld [vmem:[%s3 + $0x40] sm:$0xff]
    %v426 = vld [vmem:[%s3 + $0x48] sm:$0xff]
    %v427 = vld [vmem:[%s3 + $0x50] sm:$0xff]
    %v428 = vld [vmem:[%s3 + $0x58] sm:$0xff]
    %v429 = vld [vmem:[%s3 + $0x60] sm:$0xff]
    %v430 = vld [vmem:[%s3 + $0x68] sm:$0xff]
    %v431 = vld [vmem:[%s3 + $0x70] sm:$0xff]
    %v432 = vld [vmem:[%s3 + $0x78] sm:$0xff]
    %v433 = vld [vmem:[%s2] sm:$0xff]
    %v434 = vld [vmem:[%s2 + $0x8] sm:$0xff]
    %v435 = vld [vmem:[%s2 + $0x10] sm:$0xff]
    %v436 = vld [vmem:[%s2 + $0x18] sm:$0xff]
    %v437 = vld [vmem:[%s2 + $0x20] sm:$0xff]
    %438 = vmatprep.subr.mxu0 0.0
    %439 = vmatpush1.msra.mxu0 %v19
    %440 = vmatprep.subr.mxu0 0.0
    %441 = vmatpush1.msra.mxu0 %v20
    %442 = vmatprep.subr.mxu0 0.0
    %443 = vmatpush1.msra.mxu0 %v21
    %444 = vmatprep.subr.mxu0 0.0
    %445 = vmatpush1.msra.mxu0 %v22
    %446 = vmatprep.subr.mxu0 0.0
    %447 = vmatpush1.msra.mxu0 %v23
    %448 = vmatprep.subr.mxu0 0.0
    %449 = vmatpush1.msra.mxu0 %v24
    %450 = vmatprep.subr.mxu0 0.0
    %451 = vmatpush1.msra.mxu0 %v25
    %452 = vmatprep.subr.mxu0 0.0
    %453 = vmatpush1.msra.mxu0 %v26
    %454 = vmatprep.subr.mxu0 0.0
    %455 = vmatpush1.msra.mxu0 %v27
    %456 = vmatprep.subr.mxu0 0.0
    %457 = vmatpush1.msra.mxu0 %v28
    %458 = vmatprep.subr.mxu0 0.0
    %459 = vmatpush1.msra.mxu0 %v29
    %460 = vmatprep.subr.mxu0 0.0
    %461 = vmatpush1.msra.mxu0 %v30
    %462 = vmatprep.subr.mxu0 0.0
    %463 = vmatpush1.msra.mxu0 %v31
    %464 = vmatprep.subr.mxu0 0.0
    %465 = vmatpush1.msra.mxu0 %v32
    %466 = vmatprep.subr.mxu0 0.0
    %467 = vmatpush1.msra.mxu0 %v33
    %468 = vmatprep.subr.mxu0 0.0
    %469 = vmatpush1.msra.mxu0 %v34
    %470 = vmatprep.subr.mxu0 0.0
    %471 = vmatpush1.msra.mxu0 0.0
    %472 = vmatprep.subr.mxu0 0.0
    %473 = vmatpush1.msra.mxu0 0.0
    %474 = vmatprep.subr.mxu0 0.0
    %475 = vmatpush1.msra.mxu0 0.0
    %476 = vmatprep.subr.mxu0 0.0
    %477 = vmatpush1.msra.mxu0 0.0
    %478 = vmatprep.subr.mxu0 0.0
    %479 = vmatpush1.msra.mxu0 0.0
    %480 = vmatprep.subr.mxu0 0.0
    %481 = vmatpush1.msra.mxu0 0.0
    %482 = vmatprep.subr.mxu0 0.0
    %483 = vmatpush1.msra.mxu0 0.0
    %484 = vmatprep.subr.mxu0 0.0
    %485 = vmatpush1.msra.mxu0 0.0
    %486 = vmatprep.subr.mxu0 0.0
    %487 = vmatpush1.msra.mxu0 0.0
    %488 = vmatprep.subr.mxu0 0.0
    %489 = vmatpush1.msra.mxu0 0.0
    %490 = vmatprep.subr.mxu0 0.0
    %491 = vmatpush1.msra.mxu0 0.0
    %492 = vmatprep.subr.mxu0 0.0
    %493 = vmatpush1.msra.mxu0 0.0
    %494 = vmatprep.subr.mxu0 0.0
    %495 = vmatpush1.msra.mxu0 0.0
    %496 = vmatprep.subr.mxu0 0.0
    %497 = vmatpush1.msra.mxu0 0.0
    %498 = vmatprep.subr.mxu0 0.0
    %499 = vmatpush1.msra.mxu0 0.0
    %500 = vmatprep.subr.mxu0 0.0
    %501 = vmatpush1.msra.mxu0 0.0
    %502 = vmatprep.mubr.f32.mxu0 0.0
    %503 = vmatmul.mubr.f32.gmra.mrb[0].mxu0 %v433
    %v504 = vpop.f32.mrb[0].mxu0
    %v505 = vadd.f32 0.0, %v504
    %v506 = vpop.f32.mrb[0].mxu0
    %507 = vmatprep.mubr.f32.mxu0 0.0
    %508 = vmatmul.mubr.f32.gmra.mrb[0].mxu0 %v434
    %v509 = vpop.f32.mrb[0].mxu0
    %v510 = vadd.f32 0.0, %v509
    %v511 = vpop.f32.mrb[0].mxu0
    %512 = vmatprep.mubr.f32.mxu0 0.0
    %513 = vmatmul.mubr.f32.gmra.mrb[0].mxu0 %v435
    %v514 = vpop.f32.mrb[0].mxu0
    %v515 = vadd.f32 0.0, %v514
    %v516 = vpop.f32.mrb[0].mxu0
    %517 = vmatprep.mubr.f32.mxu0 0.0
    %518 = vmatmul.mubr.f32.gmra.mrb[0].mxu0 %v436
    %v519 = vpop.f32.mrb[0].mxu0
    %v520 = vadd.f32 0.0, %v519
    %v521 = vpop.f32.mrb[0].mxu0
    %522 = vmatprep.mubr.f32.mxu0 0.0
    %523 = vmatmul.mubr.f32.gmra.mrb[0].mxu0 %v437
    %v524 = vpop.f32.mrb[0].mxu0
    %v525 = vadd.f32 0.0, %v524
    %v526 = vpop.f32.mrb[0].mxu0
    %527 = vdwg.mxu0
    %v528 = vld [vmem:[%s2 + $0x38] sm:$0xff]
    %v529 = vld [vmem:[%s2 + $0x40] sm:$0xff]
    %v530 = vld [vmem:[%s2 + $0x48] sm:$0xff]
    %v531 = vld [vmem:[%s2 + $0x50] sm:$0xff]
    %533 = vset.pattern.permute.xlu0 32
    %534 = vperm.xlu0 %533, %v528
    %v535 = vpop.permute.xlu0 %534
    %538 = vset.pattern.permute.xlu0 32
    %539 = vperm.xlu0 %538, %v529
    %v540 = vpop.permute.xlu0 %539
    %543 = vset.pattern.permute.xlu0 32
    %544 = vperm.xlu0 %543, %v530
    %v545 = vpop.permute.xlu0 %544
    %548 = vset.pattern.permute.xlu0 32
    %549 = vperm.xlu0 %548, %v531
    %v550 = vpop.permute.xlu0 %549
    %v552 = vadd.f32 %v505, %v535
    %v553 = vadd.f32 %v510, %v540
    %v554 = vadd.f32 %v515, %v545
    %v555 = vadd.f32 %v520, %v550
    %v556 = vmax.f32 %v552, 0.0
    %v557 = vmax.f32 %v553, 0.0
    %v558 = vmax.f32 %v554, 0.0
    %v559 = vmax.f32 %v555, 0.0
    %560 = vset.pattern.permute.xlu0 33
    %561 = vperm.xlu0 %560, %v528
    %v562 = vpop.permute.xlu0 %561
    %564 = vset.pattern.permute.xlu0 33
    %565 = vperm.xlu0 %564, %v529
    %v566 = vpop.permute.xlu0 %565
    %568 = vset.pattern.permute.xlu0 33
    %569 = vperm.xlu0 %568, %v530
    %v570 = vpop.permute.xlu0 %569
    %572 = vset.pattern.permute.xlu0 33
    %573 = vperm.xlu0 %572, %v531
    %v574 = vpop.permute.xlu0 %573
    %v576 = vsel %vm268, %v528, 0
    %v578 = vsel %vm268, %v529, 0
    %v580 = vsel %vm268, %v530, 0
    %v582 = vsel %vm268, %v531, 0
    %584 = vmatprep.subr.mxu0 0.0
    %585 = vmatpush1.msra.mxu0 %v556
    %586 = vmatprep.subr.mxu0 0.0
    %587 = vmatpush1.msra.mxu0 %v557
    %588 = vmatprep.subr.mxu0 0.0
    %589 = vmatpush1.msra.mxu0 %v558
    %590 = vmatprep.subr.mxu0 0.0
    %591 = vmatpush1.msra.mxu0 %v559
    %592 = vmatprep.subr.mxu0 0.0
    %593 = vmatpush1.msra.mxu0 0.0
    %594 = vmatprep.subr.mxu0 0.0
    %595 = vmatpush1.msra.mxu0 0.0
    %596 = vmatprep.subr.mxu0 0.0
    %597 = vmatpush1.msra.mxu0 0.0
    %598 = vmatprep.subr.mxu0 0.0
    %599 = vmatpush1.msra.mxu0 0.0
    %600 = vmatprep.subr.mxu0 0.0
    %601 = vmatpush1.msra.mxu0 0.0
    %602 = vmatprep.subr.mxu0 0.0
    %603 = vmatpush1.msra.mxu0 0.0
    %604 = vmatprep.subr.mxu0 0.0
    %605 = vmatpush1.msra.mxu0 0.0
    %606 = vmatprep.subr.mxu0 0.0
    %607 = vmatpush1.msra.mxu0 0.0
    %608 = vmatprep.subr.mxu0 0.0
    %609 = vmatpush1.msra.mxu0 0.0
    %610 = vmatprep.subr.mxu0 0.0
    %611 = vmatpush1.msra.mxu0 0.0
    %612 = vmatprep.subr.mxu0 0.0
    %613 = vmatpush1.msra.mxu0 0.0
    %614 = vmatprep.subr.mxu0 0.0
    %615 = vmatpush1.msra.mxu0 0.0
    %616 = vmatprep.subr.mxu0 0.0
    %617 = vmatpush1.msra.mxu0 0.0
    %618 = vmatprep.subr.mxu0 0.0
    %619 = vmatpush1.msra.mxu0 0.0
    %620 = vmatprep.subr.mxu0 0.0
    %621 = vmatpush1.msra.mxu0 0.0
    %622 = vmatprep.subr.mxu0 0.0
    %623 = vmatpush1.msra.mxu0 0.0
    %624 = vmatprep.subr.mxu0 0.0
    %625 = vmatpush1.msra.mxu0 0.0
    %626 = vmatprep.subr.mxu0 0.0
    %627 = vmatpush1.msra.mxu0 0.0
    %628 = vmatprep.subr.mxu0 0.0
    %629 = vmatpush1.msra.mxu0 0.0
    %630 = vmatprep.subr.mxu0 0.0
    %631 = vmatpush1.msra.mxu0 0.0
    %632 = vmatprep.subr.mxu0 0.0
    %633 = vmatpush1.msra.mxu0 0.0
    %634 = vmatprep.subr.mxu0 0.0
    %635 = vmatpush1.msra.mxu0 0.0
    %636 = vmatprep.subr.mxu0 0.0
    %637 = vmatpush1.msra.mxu0 0.0
    %638 = vmatprep.subr.mxu0 0.0
    %639 = vmatpush1.msra.mxu0 0.0
    %640 = vmatprep.subr.mxu0 0.0
    %641 = vmatpush1.msra.mxu0 0.0
    %642 = vmatprep.subr.mxu0 0.0
    %643 = vmatpush1.msra.mxu0 0.0
    %644 = vmatprep.subr.mxu0 0.0
    %645 = vmatpush1.msra.mxu0 0.0
    %646 = vmatprep.subr.mxu0 0.0
    %647 = vmatpush1.msra.mxu0 0.0
    %648 = vmatprep.mubr.f32.mxu0 0.0
    %649 = vmatmul.mubr.f32.gmra.mrb[0].mxu0 %v576
    %v650 = vpop.f32.mrb[0].mxu0
    %v651 = vadd.f32 %v562, %v650
    %v652 = vpop.f32.mrb[0].mxu0
    %653 = vmatprep.mubr.f32.mxu0 0.0
    %654 = vmatmul.mubr.f32.gmra.mrb[0].mxu0 %v578
    %v655 = vpop.f32.mrb[0].mxu0
    %v656 = vadd.f32 %v566, %v655
    %v657 = vpop.f32.mrb[0].mxu0
    %658 = vmatprep.mubr.f32.mxu0 0.0
    %659 = vmatmul.mubr.f32.gmra.mrb[0].mxu0 %v580
    %v660 = vpop.f32.mrb[0].mxu0
    %v661 = vadd.f32 %v570, %v660
    %v662 = vpop.f32.mrb[0].mxu0
    %663 = vmatprep.mubr.f32.mxu0 0.0
    %664 = vmatmul.mubr.f32.gmra.mrb[0].mxu0 %v582
    %v665 = vpop.f32.mrb[0].mxu0
    %v666 = vadd.f32 %v574, %v665
    %v667 = vpop.f32.mrb[0].mxu0
    %668 = vdwg.mxu0
    %v669 = vmax.f32 %v651, 0.0
    %v670 = vmax.f32 %v656, 0.0
    %v671 = vmax.f32 %v661, 0.0
    %v672 = vmax.f32 %v666, 0.0
    %v673 = vld [vmem:[%s2 + $0x59] sm:$0x1]
    %v675 = vsel %vm268, %v673, 0
    %677 = vmatprep.subr.mxu0 0.0
    %678 = vmatpush1.msra.mxu0 %v669
    %679 = vmatprep.subr.mxu0 0.0
    %680 = vmatpush1.msra.mxu0 %v670
    %681 = vmatprep.subr.mxu0 0.0
    %682 = vmatpush1.msra.mxu0 %v671
    %683 = vmatprep.subr.mxu0 0.0
    %684 = vmatpush1.msra.mxu0 %v672
    %685 = vmatprep.subr.mxu0 0.0
    %686 = vmatpush1.msra.mxu0 0.0
    %687 = vmatprep.subr.mxu0 0.0
    %688 = vmatpush1.msra.mxu0 0.0
    %689 = vmatprep.subr.mxu0 0.0
    %690 = vmatpush1.msra.mxu0 0.0
    %691 = vmatprep.subr.mxu0 0.0
    %692 = vmatpush1.msra.mxu0 0.0
    %693 = vmatprep.subr.mxu0 0.0
    %694 = vmatpush1.msra.mxu0 0.0
    %695 = vmatprep.subr.mxu0 0.0
    %696 = vmatpush1.msra.mxu0 0.0
    %697 = vmatprep.subr.mxu0 0.0
    %698 = vmatpush1.msra.mxu0 0.0
    %699 = vmatprep.subr.mxu0 0.0
    %700 = vmatpush1.msra.mxu0 0.0
    %701 = vmatprep.subr.mxu0 0.0
    %702 = vmatpush1.msra.mxu0 0.0
    %703 = vmatprep.subr.mxu0 0.0
    %704 = vmatpush1.msra.mxu0 0.0
    %705 = vmatprep.subr.mxu0 0.0
    %706 = vmatpush1.msra.mxu0 0.0
    %707 = vmatprep.subr.mxu0 0.0
    %708 = vmatpush1.msra.mxu0 0.0
    %709 = vmatprep.subr.mxu0 0.0
    %710 = vmatpush1.msra.mxu0 0.0
    %711 = vmatprep.subr.mxu0 0.0
    %712 = vmatpush1.msra.mxu0 0.0
    %713 = vmatprep.subr.mxu0 0.0
    %714 = vmatpush1.msra.mxu0 0.0
    %715 = vmatprep.subr.mxu0 0.0
    %716 = vmatpush1.msra.mxu0 0.0
    %717 = vmatprep.subr.mxu0 0.0
    %718 = vmatpush1.msra.mxu0 0.0
    %719 = vmatprep.subr.mxu0 0.0
    %720 = vmatpush1.msra.mxu0 0.0
    %721 = vmatprep.subr.mxu0 0.0
    %722 = vmatpush1.msra.mxu0 0.0
    %723 = vmatprep.subr.mxu0 0.0
    %724 = vmatpush1.msra.mxu0 0.0
    %725 = vmatprep.subr.mxu0 0.0
    %726 = vmatpush1.msra.mxu0 0.0
    %727 = vmatprep.subr.mxu0 0.0
    %728 = vmatpush1.msra.mxu0 0.0
    %729 = vmatprep.subr.mxu0 0.0
    %730 = vmatpush1.msra.mxu0 0.0
    %731 = vmatprep.subr.mxu0 0.0
    %732 = vmatpush1.msra.mxu0 0.0
    %733 = vmatprep.subr.mxu0 0.0
    %734 = vmatpush1.msra.mxu0 0.0
    %735 = vmatprep.subr.mxu0 0.0
    %736 = vmatpush1.msra.mxu0 0.0
    %737 = vmatprep.subr.mxu0 0.0
    %738 = vmatpush1.msra.mxu0 0.0
    %739 = vmatprep.subr.mxu0 0.0
    %740 = vmatpush1.msra.mxu0 0.0
    %741 = vmatprep.mubr.f32.mxu0 0.0
    %742 = vmatmul.mubr.f32.gmra.mrb[0].mxu0 %v675
    %v743 = vpop.f32.mrb[0].mxu0
    %v744 = vadd.f32 0.0, %v743
    %v745 = vpop.f32.mrb[0].mxu0
    %746 = vdwg.mxu0
    %747 = vmatprep.subr.mxu0 0.0
    %748 = vmatpush1.msra.mxu0 %v417
    %749 = vmatprep.subr.mxu0 0.0
    %750 = vmatpush1.msra.mxu0 %v418
    %751 = vmatprep.subr.mxu0 0.0
    %752 = vmatpush1.msra.mxu0 %v419
    %753 = vmatprep.subr.mxu0 0.0
    %754 = vmatpush1.msra.mxu0 %v420
    %755 = vmatprep.subr.mxu0 0.0
    %756 = vmatpush1.msra.mxu0 %v421
    %757 = vmatprep.subr.mxu0 0.0
    %758 = vmatpush1.msra.mxu0 %v422
    %759 = vmatprep.subr.mxu0 0.0
    %760 = vmatpush1.msra.mxu0 %v423
    %761 = vmatprep.subr.mxu0 0.0
    %762 = vmatpush1.msra.mxu0 %v424
    %763 = vmatprep.subr.mxu0 0.0
    %764 = vmatpush1.msra.mxu0 %v425
    %765 = vmatprep.subr.mxu0 0.0
    %766 = vmatpush1.msra.mxu0 %v426
    %767 = vmatprep.subr.mxu0 0.0
    %768 = vmatpush1.msra.mxu0 %v427
    %769 = vmatprep.subr.mxu0 0.0
    %770 = vmatpush1.msra.mxu0 %v428
    %771 = vmatprep.subr.mxu0 0.0
    %772 = vmatpush1.msra.mxu0 %v429
    %773 = vmatprep.subr.mxu0 0.0
    %774 = vmatpush1.msra.mxu0 %v430
    %775 = vmatprep.subr.mxu0 0.0
    %776 = vmatpush1.msra.mxu0 %v431
    %777 = vmatprep.subr.mxu0 0.0
    %778 = vmatpush1.msra.mxu0 %v432
    %779 = vmatprep.subr.mxu0 0.0
    %780 = vmatpush1.msra.mxu0 0.0
    %781 = vmatprep.subr.mxu0 0.0
    %782 = vmatpush1.msra.mxu0 0.0
    %783 = vmatprep.subr.mxu0 0.0
    %784 = vmatpush1.msra.mxu0 0.0
    %785 = vmatprep.subr.mxu0 0.0
    %786 = vmatpush1.msra.mxu0 0.0
    %787 = vmatprep.subr.mxu0 0.0
    %788 = vmatpush1.msra.mxu0 0.0
    %789 = vmatprep.subr.mxu0 0.0
    %790 = vmatpush1.msra.mxu0 0.0
    %791 = vmatprep.subr.mxu0 0.0
    %792 = vmatpush1.msra.mxu0 0.0
    %793 = vmatprep.subr.mxu0 0.0
    %794 = vmatpush1.msra.mxu0 0.0
    %795 = vmatprep.subr.mxu0 0.0
    %796 = vmatpush1.msra.mxu0 0.0
    %797 = vmatprep.subr.mxu0 0.0
    %798 = vmatpush1.msra.mxu0 0.0
    %799 = vmatprep.subr.mxu0 0.0
    %800 = vmatpush1.msra.mxu0 0.0
    %801 = vmatprep.subr.mxu0 0.0
    %802 = vmatpush1.msra.mxu0 0.0
    %803 = vmatprep.subr.mxu0 0.0
    %804 = vmatpush1.msra.mxu0 0.0
    %805 = vmatprep.subr.mxu0 0.0
    %806 = vmatpush1.msra.mxu0 0.0
    %807 = vmatprep.subr.mxu0 0.0
    %808 = vmatpush1.msra.mxu0 0.0
    %809 = vmatprep.subr.mxu0 0.0
    %810 = vmatpush1.msra.mxu0 0.0
    %811 = vmatprep.mubr.f32.mxu0 0.0
    %812 = vmatmul.mubr.f32.gmra.mrb[0].mxu0 %v414
    %v813 = vpop.f32.mrb[0].mxu0
    %v814 = vadd.f32 %v525, %v813
    %v815 = vpop.f32.mrb[0].mxu0
    %816 = vdwg.mxu0
    %v817 = vadd.f32 %v814, %v744
    %v818 = vld [vmem:[%s2 + $0x5a] sm:$0x1]
    %820 = vset.pattern.permute.xlu0 0
    %821 = vperm.xlu0 %820, %v818
    %v822 = vpop.permute.xlu0 %821
    %v824 = vadd.f32 %v817, %v822
    %vm825 = vcmask 57344
    %826 = vst.msk [vmem:[#allocation2] sm:$0x1] %vm825, %v824
    // Predicated region
    $region18: #{xdeepfm_forward.1} parent=1 // pred_check
      _
    $region19: #{xdeepfm_forward.1} parent=1 // pred_check_branch
      %828 = sbr.rel (0) target = $region21
    $region20: #{xdeepfm_forward.1} parent=1 // pred_region
      %s830 = ssub.s32 16, 16
      %831 = vsyncadd [#allocation3], %s830
      %s833 = sshll.u32 [#allocation2], 4
      %s834 = int_to_ptr.vmem [resolvable:$true] %s833
      %836 = dma.vmem_to_hbm [thread:$0]  %s834, 16, %s4, [#allocation3]
    $region21: #{xdeepfm_forward.1} parent=1 // pred_fallthru
      _
    // Predicated region
    $region22: #{xdeepfm_forward.1} parent=1 // pred_check
      _
    $region23: #{xdeepfm_forward.1} parent=1 // pred_check_branch
      %838 = sbr.rel (0) target = $region25
    $region24: #{xdeepfm_forward.1} parent=1 // pred_region
      %839 = dma.done [#allocation3], 16
    $region25: #{xdeepfm_forward.1} parent=1 // pred_fallthru
      _
    %840 = vsyncpa [#allocation3], 1

</llo_original>
